<compile_context>
chip_gen: v6e
topology: v6e:2x2x1
jax: 0.10.0
libtpu: 0.0.40
codegen_flags: <defaults>
</compile_context>

<pallas_src>
import math

import numpy as np
import jax
import jax.numpy as jnp
from jax.experimental import pallas as pl
from jax.experimental.pallas import tpu as pltpu


def _round_up(x, m):
    return ((x + m - 1) // m) * m


def l2_normalize_cols(w, eps=1e-12):
    # Matches torch.nn.functional.normalize(w, dim=0): per-column L2, clamped at eps.
    n = jnp.maximum(jnp.sqrt(jnp.sum(w * w, axis=0, keepdims=True)), eps)
    return w / n


def _resident(block_shape, index_map):
    """BlockSpec for a grid-invariant operand: single VMEM buffer (Buffered(1))."""
    try:
        return pl.BlockSpec(block_shape, index_map, pipeline_mode=pl.Buffered(1))
    except TypeError:  # older jax without pipeline_mode kwarg
        return pl.BlockSpec(block_shape, index_map)


def tpu_config():
    """Generation-aware tiling / VMEM policy (v5e/v6e: 128 MiB VMEM; v7x: 64 MiB, 2x256 MXU)."""
    cap = 64 * 1024 * 1024
    try:
        cap = int(getattr(pltpu.get_tpu_info(), "vmem_capacity_bytes", cap))
    except Exception:
        pass
    gen = 0
    try:
        kind = jax.devices()[0].device_kind.lower()
        for g in (7, 6, 5, 4):
            if f"v{g}" in kind:
                gen = g
                break
    except Exception:
        pass
    big_vmem = cap >= 100 * 1024 * 1024
    return dict(
        vmem_limit=min(cap * 3 // 4, 96 * 1024 * 1024),   # 96 MiB on v5e/v6e, 48 MiB on v7x
        row_tile=512 if big_vmem else 256,                # bigger tiles where VMEM allows
        align=256 if gen >= 6 else 128,                   # MXU-native N/K alignment
    )


# ----------------------------------------------------------------------------
# Pallas kernels
# ----------------------------------------------------------------------------
def _visual_pass_kernel(alpha_ref, x_ref, wcls_ref, scale_ref, w1_ref, w2_ref,
                        conv_ref, seq_ref, adapt_ref):
    """Fused visual path for one (batch, time-tile) block.

    x_ref is a channel-major (Hp, tt) tile read straight from the (B, Hp, T)
    input; it is transposed once in-kernel (XLU slot) instead of relayouting the
    whole activation in HBM.  The shared NormLinear classifier matmul runs ONCE
    and is stored twice (conv logits, seq logits with class 0 / 3 folded into a
    scale row).  V2TAdapter WeightedResidualBlock (eval mode: dropout = identity).
    Weights arrive pre-normalized, padded, bf16, and stay VMEM-resident.
    """
    x = jnp.transpose(x_ref[...])                                     # (tt, Hp) f32
    xb = x.astype(jnp.bfloat16)

    y = jnp.dot(xb, wcls_ref[...], preferred_element_type=jnp.float32)  # (tt, Cpad) f32
    conv_ref[...] = y.astype(conv_ref.dtype)
    seq_ref[...] = (y * scale_ref[...]).astype(seq_ref.dtype)

    # WeightedResidualBlock: relu after BOTH matmuls, as in the reference.
    h = jnp.maximum(jnp.dot(xb, w1_ref[...], preferred_element_type=jnp.float32), 0.0)
    h2 = jnp.maximum(jnp.dot(h.astype(jnp.bfloat16), w2_ref[...],
                             preferred_element_type=jnp.float32), 0.0)
    # NOTE: the reference computes sigmoid(alpha) but blends with the RAW alpha
    # parameter — reproduced exactly (alpha init = 0.0 -> identity pass-through).
    alpha = alpha_ref[0]
    adapt_ref[...] = ((1.0 - alpha) * x + alpha * h2).astype(adapt_ref.dtype)


def _t2v_pool_kernel(alpha_ref, x_ref, pool_ref, w1_ref, w2_ref, o_ref):
    """T2VAdapter (WeightedResidualBlock) fused with mbart segment-mean pooling.

    Whole batch in one grid step (full-array blocks): the per-segment Python loop
    of the reference becomes one batched matmul against a precomputed (B, S, L)
    segment-mean matrix."""
    x = x_ref[...]                                                    # (B, L, Hp) f32
    xb = x.astype(jnp.bfloat16)
    h = jnp.maximum(jnp.einsum("blh,hk->blk", xb, w1_ref[...],
                               preferred_element_type=jnp.float32), 0.0)
    h2 = jnp.maximum(jnp.einsum("blh,hk->blk", h.astype(jnp.bfloat16), w2_ref[...],
                                preferred_element_type=jnp.float32), 0.0)
    alpha = alpha_ref[0]
    adapted = (1.0 - alpha) * x + alpha * h2                          # (B, L, Hp) f32
    o_ref[...] = jnp.einsum("bsl,blh->bsh", pool_ref[...], adapted,
                            preferred_element_type=jnp.float32).astype(o_ref.dtype)


# ----------------------------------------------------------------------------
# Pallas wrappers
# ----------------------------------------------------------------------------
def visual_pass(x_bht, wcls_pad, scale_row, w1n, w2n, alpha, *, row_tile, vmem_limit):
    """One fused launch over all visual rows: conv logits, seq logits, V2T adapter.

    Returns conv / seq logits already in (Tpad, B, Cpad) order (stored into a
    lane-flattened (Tpad, B*Cpad) buffer -> free reshape, no post-kernel transpose)
    plus the adapted visual features in (B, Tpad, Hp)."""
    B, Hp, T = x_bht.shape
    Cpad = wcls_pad.shape[1]
    Tpad = _round_up(T, 8)                         # sublane-align only; no over-pad to the tile
    if Tpad != T:
        x_bht = jnp.pad(x_bht, ((0, 0), (0, 0), (0, Tpad - T)))
    tt = min(row_tile, Tpad)                       # either full T or a 128-multiple row tile
    n_t = pl.cdiv(Tpad, tt)                        # ragged last block is masked by Pallas

    conv, seq, adapted = pl.pallas_call(
        _visual_pass_kernel,
        out_shape=(
            jax.ShapeDtypeStruct((Tpad, B * Cpad), jnp.float32),   # conv logits, (T,B,C)-ordered
            jax.ShapeDtypeStruct((Tpad, B * Cpad), jnp.float32),   # seq logits,  (T,B,C)-ordered
            jax.ShapeDtypeStruct((B, Tpad, Hp), jnp.float32),      # adapted visual feat
        ),
        grid=(B, n_t),
        in_specs=[
            pl.BlockSpec(memory_space=pltpu.MemorySpace.SMEM),     # alpha scalar
            pl.BlockSpec((None, Hp, tt), lambda b, t: (b, 0, t)),  # channel-major x tile
            _resident((Hp, Cpad), lambda b, t: (0, 0)),            # classifier (bf16, resident)
            _resident((1, Cpad), lambda b, t: (0, 0)),             # class-0 scale row (resident)
            _resident((Hp, Hp), lambda b, t: (0, 0)),              # v2t w1 (bf16, resident)
            _resident((Hp, Hp), lambda b, t: (0, 0)),              # v2t w2 (bf16, resident)
        ],
        out_specs=(
            pl.BlockSpec((tt, Cpad), lambda b, t: (t, b)),         # lane offset b*Cpad
            pl.BlockSpec((tt, Cpad), lambda b, t: (t, b)),
            pl.BlockSpec((None, tt, Hp), lambda b, t: (b, t, 0)),
        ),
        compiler_params=pltpu.CompilerParams(
            dimension_semantics=("parallel", "parallel"),
            vmem_limit_bytes=int(vmem_limit)),
    )(alpha, x_bht, wcls_pad, scale_row, w1n, w2n)

    # Free metadata reshape: (Tpad, B*Cpad) -> (Tpad, B, Cpad); no HBM relayout.
    return conv.reshape(Tpad, B, Cpad), seq.reshape(Tpad, B, Cpad), adapted


def t2v_pool(last_hidden_states, pool_mat, w1n, w2n, alpha, *, vmem_limit):
    """T2VAdapter + mbart pooling in a single-step launch (whole-array blocks)."""
    B, S, _ = pool_mat.shape
    Hp = last_hidden_states.shape[2]
    return pl.pallas_call(
        _t2v_pool_kernel,
        out_shape=jax.ShapeDtypeStruct((B, S, Hp), jnp.float32),
        in_specs=[
            pl.BlockSpec(memory_space=pltpu.MemorySpace.SMEM),     # alpha scalar
            pl.BlockSpec(memory_space=pltpu.MemorySpace.VMEM),     # text hidden states (full)
            pl.BlockSpec(memory_space=pltpu.MemorySpace.VMEM),     # pooling matrix (full)
            pl.BlockSpec(memory_space=pltpu.MemorySpace.VMEM),     # t2v w1 (bf16)
            pl.BlockSpec(memory_space=pltpu.MemorySpace.VMEM),     # t2v w2 (bf16)
        ],
        out_specs=pl.BlockSpec(memory_space=pltpu.MemorySpace.VMEM),
        compiler_params=pltpu.CompilerParams(vmem_limit_bytes=int(vmem_limit)),
    )(alpha, last_hidden_states, pool_mat, w1n, w2n)


# ----------------------------------------------------------------------------
# Plain-JAX / host glue
# ----------------------------------------------------------------------------
def xavier_uniform_relu(key, fan_in, fan_out):
    gain = math.sqrt(2.0)  # nn.init.calculate_gain('relu')
    bound = gain * math.sqrt(6.0 / (fan_in + fan_out))
    return jax.random.uniform(key, (fan_in, fan_out), jnp.float32, -bound, bound)


def segments_to_array(gloss_index_batch):
    """Pack the (python-list) gloss segment bounds into a (B, S, 2) int32 array once."""
    B = len(gloss_index_batch)
    S = max(len(g) for g in gloss_index_batch)
    seg = np.zeros((B, S, 2), np.int32)
    for b, segs in enumerate(gloss_index_batch):
        for s, (start, end) in enumerate(segs):
            seg[b, s] = (start, end)
    return jnp.asarray(seg)


def build_pool_matrix(seg, L):
    """On-device (B, S, L) segment-mean matrix mirroring the reference mbart_pooling:
    row s of batch b holds 1/len over [start-1, end), zero rows for padding segments.
    (Assumes 1-indexed starts as in the reference; start==0 would be a reference quirk.)"""
    start = seg[..., 0] - 1                                           # (B, S)
    end = seg[..., 1]                                                 # (B, S)
    idx = jnp.arange(L, dtype=jnp.int32)[None, None, :]               # (1, 1, L)
    mask = (idx >= start[..., None]) & (idx < end[..., None]) & (end[..., None] > 0)
    length = jnp.maximum(end - start, 1).astype(jnp.float32)[..., None]
    return mask.astype(jnp.float32) / length


def slr_forward(params, x, len_x, last_hidden_states, gloss_index_batch, cfg=None):
    cfg = cfg or tpu_config()
    B, H, T = x.shape
    L = last_hidden_states.shape[1]
    C = params["classifier_w"].shape[1]
    Hp = _round_up(H, cfg["align"])                 # MXU-aligned contraction / lane dim
    Cpad = _round_up(C, cfg["align"])               # MXU-aligned classifier output dim

    # --- one-time weight preprocessing: L2-normalize (f32) -> zero-pad -> bf16 ---
    def prep(w, rows, cols):
        wn = l2_normalize_cols(w)
        wn = jnp.pad(wn, ((0, rows - wn.shape[0]), (0, cols - wn.shape[1])))
        return wn.astype(jnp.bfloat16)

    wcls = prep(params["classifier_w"], Hp, Cpad)
    v2t_w1 = prep(params["v2t_w1"], Hp, Hp)
    v2t_w2 = prep(params["v2t_w2"], Hp, Hp)
    t2v_w1 = prep(params["t2v_w1"], Hp, Hp)
    t2v_w2 = prep(params["t2v_w2"], Hp, Hp)
    scale_row = jnp.ones((1, Cpad), jnp.float32).at[0, 0].set(1.0 / 3.0)

    # --- T2VAdapter + mbart pooling, fused into one single-step kernel launch ---
    lhs = last_hidden_states
    if Hp != H:
        lhs = jnp.pad(lhs, ((0, 0), (0, 0), (0, Hp - H)))
    seg = segments_to_array(gloss_index_batch)
    pool_mat = build_pool_matrix(seg, L)
    pooled = t2v_pool(lhs, pool_mat, t2v_w1, t2v_w2, params["t2v_alpha"],
                      vmem_limit=cfg["vmem_limit"])
    pooled_text_feat = pooled[..., :H]

    # TODO(synk): resnet34 conv2d backbone, TemporalConv and the BiLSTM temporal
    # model are external, undefined modules; treated as identity here (visual rows
    # = framewise features, feat_len unchanged).
    x_pad = x if Hp == H else jnp.pad(x, ((0, 0), (0, Hp - H), (0, 0)))
    lgt = len_x

    # --- fused visual pass: shared classifier (conv + sequence logits) + V2TAdapter ---
    conv_tbc, seq_tbc, adapted = visual_pass(
        x_pad, wcls, scale_row, v2t_w1, v2t_w2, params["v2t_alpha"],
        row_tile=cfg["row_tile"], vmem_limit=cfg["vmem_limit"])

    conv_logits = conv_tbc[:T, :, :C]                 # (T, B, C) already time-major
    sequence_logits = seq_tbc[:T, :, :C]              # (T, B, C), class 0 /3 fused
    visual_feat_adapted = adapted[:, :T, :H]          # (B, T, H)

    # TODO(synk): extract_feat + DTW alignment + beam-search Decode rely on external
    # DTW / utils.Decode utilities that are not defined; omitted rather than faked.
    return {
        "feat_len": lgt,
        "conv_logits": conv_logits,
        "sequence_logits": sequence_logits,
        "conv_sents": None,
        "recognized_sents": None,
        "pooled_text_feat": pooled_text_feat,
        "visual_feat_adapted": visual_feat_adapted,
        "averaged_feats_tensor": None,
        "loss_LiftPool_u": None,
        "loss_LiftPool_p": None,
    }


# ----------------------------------------------------------------------------
# Main
# ----------------------------------------------------------------------------
if __name__ == "__main__":
    B, T, L, H, C = 2, 8, 6, 32, 16  # batch, frames, text len, hidden, num_classes

    key = jax.random.PRNGKey(0)
    k = jax.random.split(key, 8)
    params = {
        "classifier_w": xavier_uniform_relu(k[0], H, C),
        "v2t_w1": xavier_uniform_relu(k[1], H, H),
        "v2t_w2": xavier_uniform_relu(k[2], H, H),
        "v2t_alpha": jnp.zeros((1,), jnp.float32),   # nn.Parameter(torch.tensor(0.0))
        "t2v_w1": xavier_uniform_relu(k[3], H, H),
        "t2v_w2": xavier_uniform_relu(k[4], H, H),
        "t2v_alpha": jnp.zeros((1,), jnp.float32),
    }

    x = jax.random.normal(k[5], (B, H, T), jnp.float32)                 # framewise features
    last_hidden_states = jax.random.normal(k[6], (B, L, H), jnp.float32)
    len_x = jnp.array([T, T], jnp.int32)
    gloss_index_batch = [[(1, 2), (3, 4)], [(1, 3), (4, 6)]]

    out = slr_forward(params, x, len_x, last_hidden_states, gloss_index_batch)
    jax.block_until_ready((out["sequence_logits"], out["conv_logits"],
                           out["pooled_text_feat"], out["visual_feat_adapted"]))
    print("KERNEL_OK")
</pallas_src>

<mosaic_0001>
module attributes {stable_mosaic.version = 11 : i64} {
  func.func @_t2v_pool_kernel(%arg0: memref<1xf32, #tpu.memory_space<smem>>, %arg1: memref<2x6x128xf32, #tpu.memory_space<vmem>>, %arg2: memref<2x2x6xf32, #tpu.memory_space<vmem>>, %arg3: memref<128x128xbf16, #tpu.memory_space<vmem>>, %arg4: memref<128x128xbf16, #tpu.memory_space<vmem>>, %arg5: memref<2x2x128xf32, #tpu.memory_space<vmem>>) attributes {dimension_semantics = [], scalar_prefetch = 0 : i64, scratch_operands = 0 : i64, tpu.core_type = #tpu.core_type<tc>} {
    %c0 = arith.constant 0 : index
    %c0_0 = arith.constant 0 : index
    %c0_1 = arith.constant 0 : index
    %0 = vector.load %arg1[%c0, %c0_0, %c0_1] : memref<2x6x128xf32, #tpu.memory_space<vmem>>, vector<2x6x128xf32>
    %1 = arith.truncf %0 : vector<2x6x128xf32> to vector<2x6x128xbf16>
    %c0_2 = arith.constant 0 : index
    %c0_3 = arith.constant 0 : index
    %2 = vector.load %arg3[%c0_2, %c0_3] : memref<128x128xbf16, #tpu.memory_space<vmem>>, vector<128x128xbf16>
    "tpu.trace_start"() <{level = 10 : i32, message = "blh,hk->blk"}> : () -> ()
    %cst = arith.constant dense<0.000000e+00> : vector<2x6x128xf32>
    %3 = tpu.matmul %1, %2, %cst {dimension_numbers = #tpu.dot_dimension_numbers<[2], [0], [0, 1], [1], [0, 0, 0, 1, 1, 1], [], []>} : vector<2x6x128xbf16>, vector<128x128xbf16>, vector<2x6x128xf32> -> vector<2x6x128xf32>
    "tpu.trace_stop"() : () -> ()
    %cst_4 = arith.constant 0.000000e+00 : f32
    %4 = vector.broadcast %cst_4 : f32 to vector<2x6x128xf32>
    %5 = arith.maximumf %3, %4 : vector<2x6x128xf32>
    %6 = arith.truncf %5 : vector<2x6x128xf32> to vector<2x6x128xbf16>
    %c0_5 = arith.constant 0 : index
    %c0_6 = arith.constant 0 : index
    %7 = vector.load %arg4[%c0_5, %c0_6] : memref<128x128xbf16, #tpu.memory_space<vmem>>, vector<128x128xbf16>
    "tpu.trace_start"() <{level = 10 : i32, message = "blh,hk->blk"}> : () -> ()
    %cst_7 = arith.constant dense<0.000000e+00> : vector<2x6x128xf32>
    %8 = tpu.matmul %6, %7, %cst_7 {dimension_numbers = #tpu.dot_dimension_numbers<[2], [0], [0, 1], [1], [0, 0, 0, 1, 1, 1], [], []>} : vector<2x6x128xbf16>, vector<128x128xbf16>, vector<2x6x128xf32> -> vector<2x6x128xf32>
    "tpu.trace_stop"() : () -> ()
    %cst_8 = arith.constant 0.000000e+00 : f32
    %9 = vector.broadcast %cst_8 : f32 to vector<2x6x128xf32>
    %10 = arith.maximumf %8, %9 : vector<2x6x128xf32>
    %c0_9 = arith.constant 0 : index
    %11 = memref.load %arg0[%c0_9] : memref<1xf32, #tpu.memory_space<smem>>
    %cst_10 = arith.constant 1.000000e+00 : f32
    %12 = arith.subf %cst_10, %11 : f32
    %13 = vector.broadcast %12 : f32 to vector<2x6x128xf32>
    %14 = arith.mulf %13, %0 : vector<2x6x128xf32>
    %15 = vector.broadcast %11 : f32 to vector<2x6x128xf32>
    %16 = arith.mulf %15, %10 : vector<2x6x128xf32>
    %17 = arith.addf %14, %16 : vector<2x6x128xf32>
    %c0_11 = arith.constant 0 : index
    %c0_12 = arith.constant 0 : index
    %c0_13 = arith.constant 0 : index
    %18 = vector.load %arg2[%c0_11, %c0_12, %c0_13] : memref<2x2x6xf32, #tpu.memory_space<vmem>>, vector<2x2x6xf32>
    "tpu.trace_start"() <{level = 10 : i32, message = "bsl,blh->bsh"}> : () -> ()
    %cst_14 = arith.constant dense<0.000000e+00> : vector<2x2x128xf32>
    %19 = tpu.matmul %18, %17, %cst_14 {dimension_numbers = #tpu.dot_dimension_numbers<[2], [1], [1], [2], [0, 0, 0, 1, 1, 2], [0], [0]>} : vector<2x2x6xf32>, vector<2x6x128xf32>, vector<2x2x128xf32> -> vector<2x2x128xf32>
    "tpu.trace_stop"() : () -> ()
    %c0_15 = arith.constant 0 : index
    %c0_16 = arith.constant 0 : index
    %c0_17 = arith.constant 0 : index
    %20 = vector.load %arg5[%c0_15, %c0_16, %c0_17] : memref<2x2x128xf32, #tpu.memory_space<vmem>>, vector<2x2x128xf32>
    tpu.vector_store %arg5[%c0_15, %c0_16, %c0_17], %19 {strides = array<i32>} : memref<2x2x128xf32, #tpu.memory_space<vmem>>, vector<2x2x128xf32>,
    return
  }
}

</mosaic_0001>

<llo_original>
// kernel: tpu_custom_call.1
$region0: #{tpu_custom_call.1}
  #allocation0 [shape = 'u32[]', space=smem, size = 0x4, offset = 0x4, fixed_abs, tag = 'smem constant byte address 0x4 - core index']
  #allocation1 [shape = 'u32[144,128]{1,0:T(1,128)}', space=vmem, size = 0x12000, scoped, tag = 'internal scratch']
  #allocation2 [shape = 'f32[1]{0:T(128)S(6)}', space=smem, size = 0x200, scoped, tag = 'scoped memory for tpu_custom_call.1']
  %s0 = inlined_call_operand.<no memory space> [shape: f32[1], index: 0, kind: input, shape index: {}]
  %s1 = inlined_call_operand.vmem [shape: f32[2,6,128], index: 1, kind: input, shape index: {}]
  %s2 = inlined_call_operand.vmem [shape: f32[2,2,6], index: 2, kind: input, shape index: {}]
  %s3 = inlined_call_operand.hbm [shape: bf16[128,128], index: 3, kind: input, shape index: {}]
  %s4 = inlined_call_operand.hbm [shape: bf16[128,128], index: 4, kind: input, shape index: {}]
  %s5 = inlined_call_operand.hbm [shape: f32[2,2,128], index: 5, kind: output, shape index: {}]
  %s6 = sld [smem:[#allocation0]]
  $region38: #{tpu_custom_call.1} parent=0
    _
  %s8 = ssub.s32 1, %s6
  %s9 = scalar_select 0, %s8, %s6
  %10 = sst [smem:[#allocation2]] %s0
  $region1: #{tpu_custom_call.1} parent=0
    #allocation3 [shape = 'u8[32768]{0}', space=vmem, size = 0x8000, scoped, tag = 'input window, operand 3, single buffered']
    #allocation4 [shape = 's32[1]{0}', space=sflag, size = 0x4, scoped, tag = 'scoped memory for tpu_custom_call.1']
    #allocation5 [shape = 's32[1]{0}', space=sflag, size = 0x4, scoped, tag = 'scoped memory for tpu_custom_call.1']
    #allocation6 [shape = 'u8[32768]{0}', space=vmem, size = 0x8000, scoped, tag = 'input window, operand 4, single buffered']
    #allocation7 [shape = 's32[1]{0}', space=sflag, size = 0x4, scoped, tag = 'scoped memory for tpu_custom_call.1']
    #allocation8 [shape = 'u8[2048]{0}', space=vmem, size = 0x800, scoped, tag = 'output window, operand 0, single buffered']
    %11 = vsyncpa [#allocation4], 0
    %12 = vsyncpa [#allocation7], 0
    %13 = vsyncpa [#allocation5], 0
    // Predicated region
    $region2: #{tpu_custom_call.1} parent=1 // pred_check
      _
    $region3: #{tpu_custom_call.1} parent=1 // pred_check_branch
      %15 = sbr.rel (0) target = $region5
    $region4: #{tpu_custom_call.1} parent=1 // pred_region
      _
    $region5: #{tpu_custom_call.1} parent=1 // pred_fallthru
      _
    // Predicated region
    $region6: #{tpu_custom_call.1} parent=1 // pred_check
      _
    $region7: #{tpu_custom_call.1} parent=1 // pred_check_branch
      %17 = sbr.rel (0) target = $region9
    $region8: #{tpu_custom_call.1} parent=1 // pred_region
      _
    $region9: #{tpu_custom_call.1} parent=1 // pred_fallthru
      _
    // Predicated region
    $region10: #{tpu_custom_call.1} parent=1 // pred_check
      _
    $region11: #{tpu_custom_call.1} parent=1 // pred_check_branch
      %19 = sbr.rel (0) target = $region13
    $region12: #{tpu_custom_call.1} parent=1 // pred_region
      _
    $region13: #{tpu_custom_call.1} parent=1 // pred_fallthru
      _
    // Predicated region
    $region14: #{tpu_custom_call.1} parent=1 // pred_check
      _
    $region15: #{tpu_custom_call.1} parent=1 // pred_check_branch
      %21 = sbr.rel (0) target = $region17
    $region16: #{tpu_custom_call.1} parent=1 // pred_region
      %s23 = ssub.s32 1024, 1024
      %24 = vsyncadd [#allocation4], %s23
      %s25 = sshll.u32 [#allocation3], 4
      %s26 = int_to_ptr.vmem [resolvable:$true] %s25
      %31 = dma.hbm_to_vmem [thread:$0]  %s3, 1024, %s26, [#allocation4], 64, 64, 4
    $region17: #{tpu_custom_call.1} parent=1 // pred_fallthru
      _
    // Predicated region
    $region18: #{tpu_custom_call.1} parent=1 // pred_check
      _
    $region19: #{tpu_custom_call.1} parent=1 // pred_check_branch
      %33 = sbr.rel (0) target = $region21
    $region20: #{tpu_custom_call.1} parent=1 // pred_region
      %s35 = ssub.s32 1024, 1024
      %36 = vsyncadd [#allocation7], %s35
      %s37 = sshll.u32 [#allocation6], 4
      %s38 = int_to_ptr.vmem [resolvable:$true] %s37
      %43 = dma.hbm_to_vmem [thread:$0]  %s4, 1024, %s38, [#allocation7], 64, 64, 4
    $region21: #{tpu_custom_call.1} parent=1 // pred_fallthru
      _
    // Predicated region
    $region22: #{tpu_custom_call.1} parent=1 // pred_check
      _
    $region23: #{tpu_custom_call.1} parent=1 // pred_check_branch
      %45 = sbr.rel (0) target = $region25
    $region24: #{tpu_custom_call.1} parent=1 // pred_region
      %46 = dma.done [#allocation4], 1024
    $region25: #{tpu_custom_call.1} parent=1 // pred_fallthru
      _
    // Predicated region
    $region26: #{tpu_custom_call.1} parent=1 // pred_check
      _
    $region27: #{tpu_custom_call.1} parent=1 // pred_check_branch
      %48 = sbr.rel (0) target = $region29
    $region28: #{tpu_custom_call.1} parent=1 // pred_region
      %49 = dma.done [#allocation7], 1024
    $region29: #{tpu_custom_call.1} parent=1 // pred_fallthru
      _
    %v51 = vld [vmem:[%s1] sm:$0x3f]
    %v52 = vld [vmem:[%s1 + $0x8] sm:$0x3f]
    %v53 = vpack.c.bf16 %v51, %v51
    %v54 = vpack.c.bf16 %v52, %v52
    %v55 = vld [vmem:[#allocation3] sm:$0xf]
    %v56 = vld [vmem:[#allocation3 + $0x4] sm:$0xf]
    %v57 = vld [vmem:[#allocation3 + $0x8] sm:$0xf]
    %v58 = vld [vmem:[#allocation3 + $0xc] sm:$0xf]
    %v59 = vld [vmem:[#allocation3 + $0x10] sm:$0xf]
    %v60 = vld [vmem:[#allocation3 + $0x14] sm:$0xf]
    %v61 = vld [vmem:[#allocation3 + $0x18] sm:$0xf]
    %v62 = vld [vmem:[#allocation3 + $0x1c] sm:$0xf]
    %v63 = vld [vmem:[#allocation3 + $0x20] sm:$0xf]
    %v64 = vld [vmem:[#allocation3 + $0x24] sm:$0xf]
    %v65 = vld [vmem:[#allocation3 + $0x28] sm:$0xf]
    %v66 = vld [vmem:[#allocation3 + $0x2c] sm:$0xf]
    %v67 = vld [vmem:[#allocation3 + $0x30] sm:$0xf]
    %v68 = vld [vmem:[#allocation3 + $0x34] sm:$0xf]
    %v69 = vld [vmem:[#allocation3 + $0x38] sm:$0xf]
    %v70 = vld [vmem:[#allocation3 + $0x3c] sm:$0xf]
    %v74 = vunpack.c.l.s4 1966171168
    %v75 = vunpack.c.0.s8 %v74
    %v76 = vlaneseq
    %v77 = vshrl.u32 %v76, 7
    %v78 = vsub.s32 %v75, %v77
    %v79 = vrot.slane %v53, %v78
    %v80 = vcombine.high %v79, %v79
    %v82 = vunpack.c.l.s4 1966171168
    %v83 = vunpack.c.0.s8 %v82
    %v84 = vlaneseq
    %v85 = vshrl.u32 %v84, 7
    %v86 = vsub.s32 %v83, %v85
    %v87 = vrot.slane %v79, %v86
    %v89 = vunpack.c.l.s4 1966171168
    %v90 = vunpack.c.0.s8 %v89
    %v91 = vlaneseq
    %v92 = vshrl.u32 %v91, 7
    %v93 = vsub.s32 %v90, %v92
    %v94 = vrot.slane %v80, %v93
    %v95 = vcombine.high %v87, %v87
    %v97 = vunpack.c.l.s4 1966171168
    %v98 = vunpack.c.0.s8 %v97
    %v99 = vlaneseq
    %v100 = vshrl.u32 %v99, 7
    %v101 = vsub.s32 %v98, %v100
    %v102 = vrot.slane %v54, %v101
    %v103 = vcombine.high %v102, %v102
    %v105 = vunpack.c.l.s4 1966171168
    %v106 = vunpack.c.0.s8 %v105
    %v107 = vlaneseq
    %v108 = vshrl.u32 %v107, 7
    %v109 = vsub.s32 %v106, %v108
    %v110 = vrot.slane %v102, %v109
    %v112 = vunpack.c.l.s4 1966171168
    %v113 = vunpack.c.0.s8 %v112
    %v114 = vlaneseq
    %v115 = vshrl.u32 %v114, 7
    %v116 = vsub.s32 %v113, %v115
    %v117 = vrot.slane %v103, %v116
    %v118 = vcombine.high %v110, %v110
    %v119 = vcombine.low %v87, %v94
    %v120 = vcombine.low %v95, %v110
    %v121 = vcombine.low %v117, %v118
    %v123 = vunpack.c.l.s4 1966171168
    %v124 = vunpack.c.0.s8 %v123
    %v125 = vlaneseq
    %v126 = vshrl.u32 %v125, 7
    %v127 = vsub.s32 %v124, %v126
    %v128 = vrot.slane %v119, %v127
    %v130 = vunpack.c.l.s4 1966171168
    %v131 = vunpack.c.0.s8 %v130
    %v132 = vlaneseq
    %v133 = vshrl.u32 %v132, 7
    %v134 = vsub.s32 %v131, %v133
    %v135 = vrot.slane %v120, %v134
    %v137 = vunpack.c.l.s4 1966171168
    %v138 = vunpack.c.0.s8 %v137
    %v139 = vlaneseq
    %v140 = vshrl.u32 %v139, 7
    %v141 = vsub.s32 %v138, %v140
    %v142 = vrot.slane %v121, %v141
    %v143 = vcombine.low %v128, %v135
    %v145 = vunpack.c.l.s4 1966171168
    %v146 = vunpack.c.0.s8 %v145
    %v147 = vlaneseq
    %v148 = vshrl.u32 %v147, 7
    %v149 = vsub.s32 %v146, %v148
    %v150 = vrot.slane %v143, %v149
    %v152 = vunpack.c.l.s4 1966171168
    %v153 = vunpack.c.0.s8 %v152
    %v154 = vlaneseq
    %v155 = vshrl.u32 %v154, 7
    %v156 = vsub.s32 %v153, %v155
    %v157 = vrot.slane %v142, %v156
    %v158 = vcombine.low %v150, %v157
    %v176 = vunpack.c.l.b16 %v55
    %v177 = vunpack.c.l.b16 %v56
    %v178 = vunpack.c.l.b16 %v57
    %v179 = vunpack.c.l.b16 %v58
    %v180 = vunpack.c.l.b16 %v59
    %v181 = vunpack.c.l.b16 %v60
    %v182 = vunpack.c.l.b16 %v61
    %v183 = vunpack.c.l.b16 %v62
    %v184 = vunpack.c.l.b16 %v63
    %v185 = vunpack.c.l.b16 %v64
    %v186 = vunpack.c.l.b16 %v65
    %v187 = vunpack.c.l.b16 %v66
    %v188 = vunpack.c.l.b16 %v67
    %v189 = vunpack.c.l.b16 %v68
    %v190 = vunpack.c.l.b16 %v69
    %v191 = vunpack.c.l.b16 %v70
    %v192 = vpack.c.b16 %v177, %v176
    %v193 = vpack.c.b16 %v179, %v178
    %v194 = vpack.c.b16 %v181, %v180
    %v195 = vpack.c.b16 %v183, %v182
    %v196 = vpack.c.b16 %v185, %v184
    %v197 = vpack.c.b16 %v187, %v186
    %v198 = vpack.c.b16 %v189, %v188
    %v199 = vpack.c.b16 %v191, %v190
    %208 = vmatprep.subr.bf16.mxu0 0
    %209 = vmatpush1.bf16.msra.mxu0 %v199
    %210 = vmatprep.subr.bf16.mxu0 0
    %211 = vmatpush1.bf16.msra.mxu0 %v198
    %212 = vmatprep.subr.bf16.mxu0 0
    %213 = vmatpush1.bf16.msra.mxu0 %v197
    %214 = vmatprep.subr.bf16.mxu0 0
    %215 = vmatpush1.bf16.msra.mxu0 %v196
    %216 = vmatprep.subr.bf16.mxu0 0
    %217 = vmatpush1.bf16.msra.mxu0 %v195
    %218 = vmatprep.subr.bf16.mxu0 0
    %219 = vmatpush1.bf16.msra.mxu0 %v194
    %220 = vmatprep.subr.bf16.mxu0 0
    %221 = vmatpush1.bf16.msra.mxu0 %v193
    %222 = vmatprep.subr.bf16.mxu0 0
    %223 = vmatpush1.bf16.msra.mxu0 %v192
    %224 = vmatprep.subr.bf16.mxu0 0
    %225 = vmatpush2.bf16.msra.mxu0 0
    %226 = vmatprep.subr.bf16.mxu0 0
    %227 = vmatpush2.bf16.msra.mxu0 0
    %228 = vmatprep.subr.bf16.mxu0 0
    %229 = vmatpush2.bf16.msra.mxu0 0
    %230 = vmatprep.subr.bf16.mxu0 0
    %231 = vmatpush2.bf16.msra.mxu0 0
    %232 = vmatprep.subr.bf16.mxu0 0
    %233 = vmatpush2.bf16.msra.mxu0 0
    %234 = vmatprep.subr.bf16.mxu0 0
    %235 = vmatpush2.bf16.msra.mxu0 0
    %236 = vmatprep.subr.bf16.mxu0 0
    %237 = vmatpush2.bf16.msra.mxu0 0
    %238 = vmatprep.subr.bf16.mxu0 0
    %239 = vmatpush2.bf16.msra.mxu0 0
    %240 = vmatprep.mubr.bf16.mxu0 0
    %241 = vmatmul.mubr.bf16.gmra.mxu0 %v158
    %v242 = vpop.f32.mrf.mxu0
    %v243 = vadd.f32 0.0, %v242
    %v244 = vpop.f32.mrf.mxu0
    %v245 = vpop.f32.mrf.mxu0
    %v246 = vadd.f32 0.0, %v245
    %v247 = vpop.f32.mrf.mxu0
    %248 = vdwg.mxu0
    %v251 = vcombine.high %v243, %v243
    %v253 = vunpack.c.l.s4 1983009808
    %v254 = vunpack.c.0.s8 %v253
    %v255 = vlaneseq
    %v256 = vshrl.u32 %v255, 7
    %v257 = vsub.s32 %v254, %v256
    %v258 = vrot.slane %v243, %v257
    %v260 = vunpack.c.l.s4 1983009808
    %v261 = vunpack.c.0.s8 %v260
    %v262 = vlaneseq
    %v263 = vshrl.u32 %v262, 7
    %v264 = vsub.s32 %v261, %v263
    %v265 = vrot.slane %v251, %v264
    %v266 = vcombine.high %v258, %v258
    %v267 = vcombine.high %v265, %v265
    %v269 = vunpack.c.l.s4 1983009808
    %v270 = vunpack.c.0.s8 %v269
    %v271 = vlaneseq
    %v272 = vshrl.u32 %v271, 7
    %v273 = vsub.s32 %v270, %v272
    %v274 = vrot.slane %v246, %v273
    %v275 = vcombine.high %v274, %v274
    %v282 = vmax.f32 %v258, 0.0
    %v283 = vmax.f32 %v266, 0.0
    %v284 = vmax.f32 %v265, 0.0
    %v285 = vmax.f32 %v267, 0.0
    %v286 = vmax.f32 %v274, 0.0
    %v287 = vmax.f32 %v275, 0.0
    %v294 = vcombine.low %v282, %v283
    %v296 = vunpack.c.l.s4 1983009808
    %v297 = vunpack.c.0.s8 %v296
    %v298 = vlaneseq
    %v299 = vshrl.u32 %v298, 7
    %v300 = vsub.s32 %v297, %v299
    %v301 = vrot.slane %v294, %v300
    %v303 = vunpack.c.l.s4 1983009808
    %v304 = vunpack.c.0.s8 %v303
    %v305 = vlaneseq
    %v306 = vshrl.u32 %v305, 7
    %v307 = vsub.s32 %v304, %v306
    %v308 = vrot.slane %v284, %v307
    %v309 = vcombine.low %v301, %v308
    %v310 = vcombine.low %v285, %v286
    %v312 = vunpack.c.l.s4 1983009808
    %v313 = vunpack.c.0.s8 %v312
    %v314 = vlaneseq
    %v315 = vshrl.u32 %v314, 7
    %v316 = vsub.s32 %v313, %v315
    %v317 = vrot.slane %v310, %v316
    %v319 = vunpack.c.l.s4 1983009808
    %v320 = vunpack.c.0.s8 %v319
    %v321 = vlaneseq
    %v322 = vshrl.u32 %v321, 7
    %v323 = vsub.s32 %v320, %v322
    %v324 = vrot.slane %v287, %v323
    %v325 = vcombine.low %v317, %v324
    %v328 = vpack.c.bf16 %v309, %v309
    %v329 = vpack.c.bf16 %v325, %v325
    %v330 = vld [vmem:[#allocation6] sm:$0xf]
    %v331 = vld [vmem:[#allocation6 + $0x4] sm:$0xf]
    %v332 = vld [vmem:[#allocation6 + $0x8] sm:$0xf]
    %v333 = vld [vmem:[#allocation6 + $0xc] sm:$0xf]
    %v334 = vld [vmem:[#allocation6 + $0x10] sm:$0xf]
    %v335 = vld [vmem:[#allocation6 + $0x14] sm:$0xf]
    %v336 = vld [vmem:[#allocation6 + $0x18] sm:$0xf]
    %v337 = vld [vmem:[#allocation6 + $0x1c] sm:$0xf]
    %v338 = vld [vmem:[#allocation6 + $0x20] sm:$0xf]
    %v339 = vld [vmem:[#allocation6 + $0x24] sm:$0xf]
    %v340 = vld [vmem:[#allocation6 + $0x28] sm:$0xf]
    %v341 = vld [vmem:[#allocation6 + $0x2c] sm:$0xf]
    %v342 = vld [vmem:[#allocation6 + $0x30] sm:$0xf]
    %v343 = vld [vmem:[#allocation6 + $0x34] sm:$0xf]
    %v344 = vld [vmem:[#allocation6 + $0x38] sm:$0xf]
    %v345 = vld [vmem:[#allocation6 + $0x3c] sm:$0xf]
    %v349 = vunpack.c.l.s4 1966171168
    %v350 = vunpack.c.0.s8 %v349
    %v351 = vlaneseq
    %v352 = vshrl.u32 %v351, 7
    %v353 = vsub.s32 %v350, %v352
    %v354 = vrot.slane %v328, %v353
    %v355 = vcombine.high %v354, %v354
    %v357 = vunpack.c.l.s4 1966171168
    %v358 = vunpack.c.0.s8 %v357
    %v359 = vlaneseq
    %v360 = vshrl.u32 %v359, 7
    %v361 = vsub.s32 %v358, %v360
    %v362 = vrot.slane %v354, %v361
    %v364 = vunpack.c.l.s4 1966171168
    %v365 = vunpack.c.0.s8 %v364
    %v366 = vlaneseq
    %v367 = vshrl.u32 %v366, 7
    %v368 = vsub.s32 %v365, %v367
    %v369 = vrot.slane %v355, %v368
    %v370 = vcombine.high %v362, %v362
    %v372 = vunpack.c.l.s4 1966171168
    %v373 = vunpack.c.0.s8 %v372
    %v374 = vlaneseq
    %v375 = vshrl.u32 %v374, 7
    %v376 = vsub.s32 %v373, %v375
    %v377 = vrot.slane %v329, %v376
    %v378 = vcombine.high %v377, %v377
    %v380 = vunpack.c.l.s4 1966171168
    %v381 = vunpack.c.0.s8 %v380
    %v382 = vlaneseq
    %v383 = vshrl.u32 %v382, 7
    %v384 = vsub.s32 %v381, %v383
    %v385 = vrot.slane %v377, %v384
    %v387 = vunpack.c.l.s4 1966171168
    %v388 = vunpack.c.0.s8 %v387
    %v389 = vlaneseq
    %v390 = vshrl.u32 %v389, 7
    %v391 = vsub.s32 %v388, %v390
    %v392 = vrot.slane %v378, %v391
    %v393 = vcombine.high %v385, %v385
    %v394 = vcombine.low %v362, %v369
    %v395 = vcombine.low %v370, %v385
    %v396 = vcombine.low %v392, %v393
    %v398 = vunpack.c.l.s4 1966171168
    %v399 = vunpack.c.0.s8 %v398
    %v400 = vlaneseq
    %v401 = vshrl.u32 %v400, 7
    %v402 = vsub.s32 %v399, %v401
    %v403 = vrot.slane %v394, %v402
    %v405 = vunpack.c.l.s4 1966171168
    %v406 = vunpack.c.0.s8 %v405
    %v407 = vlaneseq
    %v408 = vshrl.u32 %v407, 7
    %v409 = vsub.s32 %v406, %v408
    %v410 = vrot.slane %v395, %v409
    %v412 = vunpack.c.l.s4 1966171168
    %v413 = vunpack.c.0.s8 %v412
    %v414 = vlaneseq
    %v415 = vshrl.u32 %v414, 7
    %v416 = vsub.s32 %v413, %v415
    %v417 = vrot.slane %v396, %v416
    %v418 = vcombine.low %v403, %v410
    %v420 = vunpack.c.l.s4 1966171168
    %v421 = vunpack.c.0.s8 %v420
    %v422 = vlaneseq
    %v423 = vshrl.u32 %v422, 7
    %v424 = vsub.s32 %v421, %v423
    %v425 = vrot.slane %v418, %v424
    %v427 = vunpack.c.l.s4 1966171168
    %v428 = vunpack.c.0.s8 %v427
    %v429 = vlaneseq
    %v430 = vshrl.u32 %v429, 7
    %v431 = vsub.s32 %v428, %v430
    %v432 = vrot.slane %v417, %v431
    %v433 = vcombine.low %v425, %v432
    %v451 = vunpack.c.l.b16 %v330
    %v452 = vunpack.c.l.b16 %v331
    %v453 = vunpack.c.l.b16 %v332
    %v454 = vunpack.c.l.b16 %v333
    %v455 = vunpack.c.l.b16 %v334
    %v456 = vunpack.c.l.b16 %v335
    %v457 = vunpack.c.l.b16 %v336
    %v458 = vunpack.c.l.b16 %v337
    %v459 = vunpack.c.l.b16 %v338
    %v460 = vunpack.c.l.b16 %v339
    %v461 = vunpack.c.l.b16 %v340
    %v462 = vunpack.c.l.b16 %v341
    %v463 = vunpack.c.l.b16 %v342
    %v464 = vunpack.c.l.b16 %v343
    %v465 = vunpack.c.l.b16 %v344
    %v466 = vunpack.c.l.b16 %v345
    %v467 = vpack.c.b16 %v452, %v451
    %v468 = vpack.c.b16 %v454, %v453
    %v469 = vpack.c.b16 %v456, %v455
    %v470 = vpack.c.b16 %v458, %v457
    %v471 = vpack.c.b16 %v460, %v459
    %v472 = vpack.c.b16 %v462, %v461
    %v473 = vpack.c.b16 %v464, %v463
    %v474 = vpack.c.b16 %v466, %v465
    %483 = vmatprep.subr.bf16.mxu0 0
    %484 = vmatpush1.bf16.msra.mxu0 %v474
    %485 = vmatprep.subr.bf16.mxu0 0
    %486 = vmatpush1.bf16.msra.mxu0 %v473
    %487 = vmatprep.subr.bf16.mxu0 0
    %488 = vmatpush1.bf16.msra.mxu0 %v472
    %489 = vmatprep.subr.bf16.mxu0 0
    %490 = vmatpush1.bf16.msra.mxu0 %v471
    %491 = vmatprep.subr.bf16.mxu0 0
    %492 = vmatpush1.bf16.msra.mxu0 %v470
    %493 = vmatprep.subr.bf16.mxu0 0
    %494 = vmatpush1.bf16.msra.mxu0 %v469
    %495 = vmatprep.subr.bf16.mxu0 0
    %496 = vmatpush1.bf16.msra.mxu0 %v468
    %497 = vmatprep.subr.bf16.mxu0 0
    %498 = vmatpush1.bf16.msra.mxu0 %v467
    %499 = vmatprep.subr.bf16.mxu0 0
    %500 = vmatpush2.bf16.msra.mxu0 0
    %501 = vmatprep.subr.bf16.mxu0 0
    %502 = vmatpush2.bf16.msra.mxu0 0
    %503 = vmatprep.subr.bf16.mxu0 0
    %504 = vmatpush2.bf16.msra.mxu0 0
    %505 = vmatprep.subr.bf16.mxu0 0
    %506 = vmatpush2.bf16.msra.mxu0 0
    %507 = vmatprep.subr.bf16.mxu0 0
    %508 = vmatpush2.bf16.msra.mxu0 0
    %509 = vmatprep.subr.bf16.mxu0 0
    %510 = vmatpush2.bf16.msra.mxu0 0
    %511 = vmatprep.subr.bf16.mxu0 0
    %512 = vmatpush2.bf16.msra.mxu0 0
    %513 = vmatprep.subr.bf16.mxu0 0
    %514 = vmatpush2.bf16.msra.mxu0 0
    %515 = vmatprep.mubr.bf16.mxu0 0
    %516 = vmatmul.mubr.bf16.gmra.mxu0 %v433
    %v517 = vpop.f32.mrf.mxu0
    %v518 = vadd.f32 0.0, %v517
    %v519 = vpop.f32.mrf.mxu0
    %v520 = vpop.f32.mrf.mxu0
    %v521 = vadd.f32 0.0, %v520
    %v522 = vpop.f32.mrf.mxu0
    %523 = vdwg.mxu0
    %v526 = vcombine.high %v518, %v518
    %v528 = vunpack.c.l.s4 1983009808
    %v529 = vunpack.c.0.s8 %v528
    %v530 = vlaneseq
    %v531 = vshrl.u32 %v530, 7
    %v532 = vsub.s32 %v529, %v531
    %v533 = vrot.slane %v518, %v532
    %v535 = vunpack.c.l.s4 1983009808
    %v536 = vunpack.c.0.s8 %v535
    %v537 = vlaneseq
    %v538 = vshrl.u32 %v537, 7
    %v539 = vsub.s32 %v536, %v538
    %v540 = vrot.slane %v526, %v539
    %v541 = vcombine.high %v533, %v533
    %v542 = vcombine.high %v540, %v540
    %v544 = vunpack.c.l.s4 1983009808
    %v545 = vunpack.c.0.s8 %v544
    %v546 = vlaneseq
    %v547 = vshrl.u32 %v546, 7
    %v548 = vsub.s32 %v545, %v547
    %v549 = vrot.slane %v521, %v548
    %v550 = vcombine.high %v549, %v549
    %v557 = vmax.f32 %v533, 0.0
    %v558 = vmax.f32 %v541, 0.0
    %v559 = vmax.f32 %v540, 0.0
    %v560 = vmax.f32 %v542, 0.0
    %v561 = vmax.f32 %v549, 0.0
    %v562 = vmax.f32 %v550, 0.0
    %s563 = sld [smem:[#allocation2]]
    %s564 = ssub.f32 1.0, %s563
    %v565 = vstv %s564
    %v566 = vmul.f32 %v565, %v51
    %v567 = vmul.f32 %v565, %v52
    %v568 = vstv %s563
    %v569 = vmul.f32 %v568, %v557
    %v570 = vmul.f32 %v568, %v558
    %v571 = vmul.f32 %v568, %v559
    %v572 = vmul.f32 %v568, %v560
    %v573 = vmul.f32 %v568, %v561
    %v574 = vmul.f32 %v568, %v562
    %v581 = vcombine.low %v569, %v570
    %v583 = vunpack.c.l.s4 1983009808
    %v584 = vunpack.c.0.s8 %v583
    %v585 = vlaneseq
    %v586 = vshrl.u32 %v585, 7
    %v587 = vsub.s32 %v584, %v586
    %v588 = vrot.slane %v581, %v587
    %v590 = vunpack.c.l.s4 1983009808
    %v591 = vunpack.c.0.s8 %v590
    %v592 = vlaneseq
    %v593 = vshrl.u32 %v592, 7
    %v594 = vsub.s32 %v591, %v593
    %v595 = vrot.slane %v571, %v594
    %v596 = vcombine.low %v588, %v595
    %v597 = vcombine.low %v572, %v573
    %v599 = vunpack.c.l.s4 1983009808
    %v600 = vunpack.c.0.s8 %v599
    %v601 = vlaneseq
    %v602 = vshrl.u32 %v601, 7
    %v603 = vsub.s32 %v600, %v602
    %v604 = vrot.slane %v597, %v603
    %v606 = vunpack.c.l.s4 1983009808
    %v607 = vunpack.c.0.s8 %v606
    %v608 = vlaneseq
    %v609 = vshrl.u32 %v608, 7
    %v610 = vsub.s32 %v607, %v609
    %v611 = vrot.slane %v574, %v610
    %v612 = vcombine.low %v604, %v611
    %v615 = vadd.f32 %v566, %v596
    %v616 = vadd.f32 %v567, %v612
    %v617 = vld [vmem:[%s2] sm:$0x3]
    %v618 = vld [vmem:[%s2 + $0x2] sm:$0x3]
    %vm619 = vcmask 48128
    %v621 = vsel %vm619, %v617, 0
    %vm623 = vcmask 1045504
    %v625 = vsel %vm623, %v615, 0
    %627 = vmatprep.subr.mxu0 0.0
    %628 = vmatpush1.msra.mxu0 0.0
    %629 = vmatprep.subr.mxu0 0.0
    %630 = vmatpush1.msra.mxu0 0.0
    %631 = vmatprep.subr.mxu0 0.0
    %632 = vmatpush1.msra.mxu0 0.0
    %633 = vmatprep.subr.mxu0 0.0
    %634 = vmatpush1.msra.mxu0 0.0
    %635 = vmatprep.subr.mxu0 0.0
    %636 = vmatpush1.msra.mxu0 0.0
    %637 = vmatprep.subr.mxu0 0.0
    %638 = vmatpush1.msra.mxu0 0.0
    %639 = vmatprep.subr.mxu0 0.0
    %640 = vmatpush1.msra.mxu0 0.0
    %641 = vmatprep.subr.mxu0 0.0
    %642 = vmatpush1.msra.mxu0 0.0
    %643 = vmatprep.subr.mxu0 0.0
    %644 = vmatpush1.msra.mxu0 0.0
    %645 = vmatprep.subr.mxu0 0.0
    %646 = vmatpush1.msra.mxu0 0.0
    %647 = vmatprep.subr.mxu0 0.0
    %648 = vmatpush1.msra.mxu0 0.0
    %649 = vmatprep.subr.mxu0 0.0
    %650 = vmatpush1.msra.mxu0 0.0
    %651 = vmatprep.subr.mxu0 0.0
    %652 = vmatpush1.msra.mxu0 0.0
    %653 = vmatprep.subr.mxu0 0.0
    %654 = vmatpush1.msra.mxu0 0.0
    %655 = vmatprep.subr.mxu0 0.0
    %656 = vmatpush1.msra.mxu0 0.0
    %657 = vmatprep.subr.mxu0 0.0
    %658 = vmatpush1.msra.mxu0 %v625
    %659 = vmatprep.subr.mxu0 0.0
    %660 = vmatpush2.msra.mxu0 0.0
    %661 = vmatprep.subr.mxu0 0.0
    %662 = vmatpush2.msra.mxu0 0.0
    %663 = vmatprep.subr.mxu0 0.0
    %664 = vmatpush2.msra.mxu0 0.0
    %665 = vmatprep.subr.mxu0 0.0
    %666 = vmatpush2.msra.mxu0 0.0
    %667 = vmatprep.subr.mxu0 0.0
    %668 = vmatpush2.msra.mxu0 0.0
    %669 = vmatprep.subr.mxu0 0.0
    %670 = vmatpush2.msra.mxu0 0.0
    %671 = vmatprep.subr.mxu0 0.0
    %672 = vmatpush2.msra.mxu0 0.0
    %673 = vmatprep.subr.mxu0 0.0
    %674 = vmatpush2.msra.mxu0 0.0
    %675 = vmatprep.subr.mxu0 0.0
    %676 = vmatpush2.msra.mxu0 0.0
    %677 = vmatprep.subr.mxu0 0.0
    %678 = vmatpush2.msra.mxu0 0.0
    %679 = vmatprep.subr.mxu0 0.0
    %680 = vmatpush2.msra.mxu0 0.0
    %681 = vmatprep.subr.mxu0 0.0
    %682 = vmatpush2.msra.mxu0 0.0
    %683 = vmatprep.subr.mxu0 0.0
    %684 = vmatpush2.msra.mxu0 0.0
    %685 = vmatprep.subr.mxu0 0.0
    %686 = vmatpush2.msra.mxu0 0.0
    %687 = vmatprep.subr.mxu0 0.0
    %688 = vmatpush2.msra.mxu0 0.0
    %689 = vmatprep.subr.mxu0 0.0
    %690 = vmatpush2.msra.mxu0 0.0
    %691 = vmatprep.mubr.f32.mxu0 0.0
    %692 = vmatmul.mubr.f32.gmra.mxu0 %v621
    %v693 = vpop.f32.mrf.mxu0
    %v694 = vadd.f32 0.0, %v693
    %v695 = vpop.f32.mrf.mxu0
    %696 = vdwg.mxu0
    %v698 = vsel %vm619, %v618, 0
    %v701 = vsel %vm623, %v616, 0
    %703 = vmatprep.subr.mxu0 0.0
    %704 = vmatpush1.msra.mxu0 0.0
    %705 = vmatprep.subr.mxu0 0.0
    %706 = vmatpush1.msra.mxu0 0.0
    %707 = vmatprep.subr.mxu0 0.0
    %708 = vmatpush1.msra.mxu0 0.0
    %709 = vmatprep.subr.mxu0 0.0
    %710 = vmatpush1.msra.mxu0 0.0
    %711 = vmatprep.subr.mxu0 0.0
    %712 = vmatpush1.msra.mxu0 0.0
    %713 = vmatprep.subr.mxu0 0.0
    %714 = vmatpush1.msra.mxu0 0.0
    %715 = vmatprep.subr.mxu0 0.0
    %716 = vmatpush1.msra.mxu0 0.0
    %717 = vmatprep.subr.mxu0 0.0
    %718 = vmatpush1.msra.mxu0 0.0
    %719 = vmatprep.subr.mxu0 0.0
    %720 = vmatpush1.msra.mxu0 0.0
    %721 = vmatprep.subr.mxu0 0.0
    %722 = vmatpush1.msra.mxu0 0.0
    %723 = vmatprep.subr.mxu0 0.0
    %724 = vmatpush1.msra.mxu0 0.0
    %725 = vmatprep.subr.mxu0 0.0
    %726 = vmatpush1.msra.mxu0 0.0
    %727 = vmatprep.subr.mxu0 0.0
    %728 = vmatpush1.msra.mxu0 0.0
    %729 = vmatprep.subr.mxu0 0.0
    %730 = vmatpush1.msra.mxu0 0.0
    %731 = vmatprep.subr.mxu0 0.0
    %732 = vmatpush1.msra.mxu0 0.0
    %733 = vmatprep.subr.mxu0 0.0
    %734 = vmatpush1.msra.mxu0 %v701
    %735 = vmatprep.subr.mxu0 0.0
    %736 = vmatpush2.msra.mxu0 0.0
    %737 = vmatprep.subr.mxu0 0.0
    %738 = vmatpush2.msra.mxu0 0.0
    %739 = vmatprep.subr.mxu0 0.0
    %740 = vmatpush2.msra.mxu0 0.0
    %741 = vmatprep.subr.mxu0 0.0
    %742 = vmatpush2.msra.mxu0 0.0
    %743 = vmatprep.subr.mxu0 0.0
    %744 = vmatpush2.msra.mxu0 0.0
    %745 = vmatprep.subr.mxu0 0.0
    %746 = vmatpush2.msra.mxu0 0.0
    %747 = vmatprep.subr.mxu0 0.0
    %748 = vmatpush2.msra.mxu0 0.0
    %749 = vmatprep.subr.mxu0 0.0
    %750 = vmatpush2.msra.mxu0 0.0
    %751 = vmatprep.subr.mxu0 0.0
    %752 = vmatpush2.msra.mxu0 0.0
    %753 = vmatprep.subr.mxu0 0.0
    %754 = vmatpush2.msra.mxu0 0.0
    %755 = vmatprep.subr.mxu0 0.0
    %756 = vmatpush2.msra.mxu0 0.0
    %757 = vmatprep.subr.mxu0 0.0
    %758 = vmatpush2.msra.mxu0 0.0
    %759 = vmatprep.subr.mxu0 0.0
    %760 = vmatpush2.msra.mxu0 0.0
    %761 = vmatprep.subr.mxu0 0.0
    %762 = vmatpush2.msra.mxu0 0.0
    %763 = vmatprep.subr.mxu0 0.0
    %764 = vmatpush2.msra.mxu0 0.0
    %765 = vmatprep.subr.mxu0 0.0
    %766 = vmatpush2.msra.mxu0 0.0
    %767 = vmatprep.mubr.f32.mxu0 0.0
    %768 = vmatmul.mubr.f32.gmra.mxu0 %v698
    %v769 = vpop.f32.mrf.mxu0
    %v770 = vadd.f32 0.0, %v769
    %v771 = vpop.f32.mrf.mxu0
    %772 = vdwg.mxu0
    %773 = vst [vmem:[#allocation8] sm:$0x3] %v694
    %774 = vst [vmem:[#allocation8 + $0x2] sm:$0x3] %v770
    // Predicated region
    $region30: #{tpu_custom_call.1} parent=1 // pred_check
      _
    $region31: #{tpu_custom_call.1} parent=1 // pred_check_branch
      %776 = sbr.rel (0) target = $region33
    $region32: #{tpu_custom_call.1} parent=1 // pred_region
      %s778 = ssub.s32 64, 64
      %779 = vsyncadd [#allocation5], %s778
      %s780 = sshll.u32 [#allocation8], 4
      %s781 = int_to_ptr.vmem [resolvable:$true] %s780
      %786 = dma.vmem_to_hbm [thread:$0]  %s781, 64, %s5, [#allocation5], 32, 32, 2
    $region33: #{tpu_custom_call.1} parent=1 // pred_fallthru
      _
    // Predicated region
    $region34: #{tpu_custom_call.1} parent=1 // pred_check
      _
    $region35: #{tpu_custom_call.1} parent=1 // pred_check_branch
      %788 = sbr.rel (0) target = $region37
    $region36: #{tpu_custom_call.1} parent=1 // pred_region
      %789 = dma.done [#allocation5], 64
    $region37: #{tpu_custom_call.1} parent=1 // pred_fallthru
      _
    %790 = vsyncpa [#allocation4], 1
    %791 = vsyncpa [#allocation7], 1
    %792 = vsyncpa [#allocation5], 1

</llo_original>
